<compile_context>
chip_gen: v7x
topology: tpu7x:2x2x1
jax: 0.10.0
libtpu: 0.0.40
codegen_flags: <defaults>
</compile_context>

<pallas_src>
import jax
import jax.numpy as jnp
from jax.experimental import pallas as pl
from jax.experimental.pallas import tpu as pltpu

LN_EPS = 1e-5
_MIB = 1024 * 1024


def _round_up(x, m):
    return (x + m - 1) // m * m


def head_kernel(x_ref, w1_ref, ln_ref, w2_ref, b2_ref, o_ref):
    # x_ref: (tm, H)   w1_ref: (H, H)   ln_ref: (3, H) rows = [b1, gamma, beta]
    # w2_ref: (H, Op)  b2_ref: (1, Op)  o_ref: (tm, Op)
    # Hoist small params once; all pointwise math in f32 (v5e has no bf16 VPU/EUP).
    ln = ln_ref[...].astype(jnp.float32)        # (3, H)
    b1 = ln[0:1, :]                             # (1, H)
    gamma = ln[1:2, :]                          # (1, H)
    beta = ln[2:3, :]                           # (1, H)
    b2 = b2_ref[...].astype(jnp.float32)        # (1, Op)

    # dense: x @ W1 + b1 (MXU; native operand dtype, f32 accumulation).
    h = jnp.dot(x_ref[...], w1_ref[...], preferred_element_type=jnp.float32) + b1

    # LayerNorm over last dim — two-pass stats (numerically robust, matches PyTorch).
    mu = jnp.mean(h, axis=-1, keepdims=True)
    c = h - mu
    var = jnp.mean(c * c, axis=-1, keepdims=True)
    hn = c * jax.lax.rsqrt(var + LN_EPS) * gamma + beta

    # ReLU
    a = jnp.maximum(hn, 0.0)

    # out_proj: a @ W2 + b2.  The cast stays in-kernel (VPU filler hidden under the
    # MXU); it is a no-op when weights are f32.
    out = jnp.dot(a.astype(w2_ref.dtype), w2_ref[...],
                  preferred_element_type=jnp.float32) + b2

    o_ref[...] = out.astype(o_ref.dtype)


def _tpu_budget():
    """Returns (vmem_limit_cap_bytes, tm_max) for the local chip generation."""
    try:
        cap_phys = int(getattr(pltpu.get_tpu_info(), "vmem_capacity_bytes"))
    except Exception:
        cap_phys = 64 * _MIB            # conservative (v7x-sized) fallback
    if cap_phys >= 100 * _MIB:          # v5e / v6e: 128 MiB physical per TC
        return 104 * _MIB, 1024
    return 56 * _MIB, 512               # v7x: 64 MiB physical per TC


def _vmem_estimate(tm, H, Op, act_bytes, w_bytes, weight_bufs, io_bufs):
    return (io_bufs * tm * H * act_bytes            # pipelined x tiles
            + io_bufs * tm * Op * act_bytes         # pipelined out tiles
            + weight_bufs * (H * H + H * Op) * w_bytes
            + weight_bufs * (3 * H + Op) * 4
            + 3 * tm * H * 4                        # live f32 intermediates h / (h-mu) / a
            + tm * Op * 4)                          # f32 out before the store cast


def multiclass_head(x, w1_t, b1, ln_g, ln_b, w2_t, b2, *, tm_max=None):
    """x: (B, T, H). Returns attr_logits: (B, T, O).

    w1_t: (H, H) dense weight stored as (in, out); w2_t: (H, O) out_proj weight (in, out).
    """
    B, T, H = x.shape
    O = w2_t.shape[1]
    rows = B * T

    vmem_cap, gen_tm_max = _tpu_budget()
    if tm_max is None:
        tm_max = gen_tm_max

    # Lane-dense output: pad out_features up to a multiple of 128.
    Op = _round_up(O, 128)

    # Row tile: multiple of 256 (MXU width) when there are enough rows, multiple of
    # 8 sublanes otherwise.
    align = 256 if rows >= 256 else 8
    tm = min(tm_max, _round_up(rows, align))
    # v7x has 2 TensorCores: make sure the "parallel" grid has >= 2 steps.
    if pl.cdiv(rows, tm) < 2 and rows > align:
        tm = _round_up(pl.cdiv(rows, 2), align)

    act_bytes = jnp.dtype(x.dtype).itemsize
    w_bytes = jnp.dtype(w1_t.dtype).itemsize
    small_h = H <= 256                      # HBM/DMA-bound regime -> deeper io pipeline
    io_bufs = 3 if small_h else 2

    # Shrink tm if the footprint (incl. f32 intermediates) busts the per-chip budget.
    while tm > align and _vmem_estimate(tm, H, Op, act_bytes, w_bytes, 1, io_bufs) > vmem_cap:
        new_tm = max(align, _round_up(tm // 2, align))
        if new_tm == tm:
            break
        tm = new_tm

    est = _vmem_estimate(tm, H, Op, act_bytes, w_bytes, 1, io_bufs)
    vmem_limit = int(min(max(int(1.5 * est), 32 * _MIB), vmem_cap))

    # No wrapper-side row pad (would be a full extra HBM copy of x); Pallas masks the
    # trailing partial block's stores, and LayerNorm/matmuls are row-wise so garbage
    # rows in the last block never contaminate valid rows.
    x2 = x.reshape(rows, H)

    # Fold LayerNorm affine params and dense bias into one (3, H) operand.
    ln_params = jnp.stack([b1, ln_g, ln_b], axis=0)
    w2_p = w2_t if Op == O else jnp.pad(w2_t, ((0, 0), (0, Op - O)))
    b2_p = (b2 if Op == O else jnp.pad(b2, (0, Op - O))).reshape(1, Op)

    grid = (pl.cdiv(rows, tm),)

    def build(single_buffer_weights, deep_io):
        kw_w = dict(pipeline_mode=pl.Buffered(1)) if single_buffer_weights else {}
        kw_io = dict(pipeline_mode=pl.Buffered(3)) if (deep_io and small_h) else {}
        in_specs = [
            pl.BlockSpec((tm, H), lambda i: (i, 0), **kw_io),   # x row tile
            pl.BlockSpec((H, H), lambda i: (0, 0), **kw_w),     # dense weight (in, out)
            pl.BlockSpec((3, H), lambda i: (0, 0), **kw_w),     # [b1, gamma, beta]
            pl.BlockSpec((H, Op), lambda i: (0, 0), **kw_w),    # out_proj weight (padded cols)
            pl.BlockSpec((1, Op), lambda i: (0, 0), **kw_w),    # out_proj bias (padded)
        ]
        out_spec = pl.BlockSpec((tm, Op), lambda i: (i, 0), **kw_io)
        return pl.pallas_call(
            head_kernel,
            out_shape=jax.ShapeDtypeStruct((rows, Op), x.dtype),
            grid_spec=pltpu.PrefetchScalarGridSpec(
                num_scalar_prefetch=0,
                grid=grid,
                in_specs=in_specs,
                out_specs=out_spec,
            ),
            compiler_params=pltpu.CompilerParams(
                dimension_semantics=("parallel",),
                vmem_limit_bytes=vmem_limit),
        )

    # Prefer single-buffered weights (+ deep io pipeline for small H); fall back to
    # default buffering if this JAX build rejects a pipeline_mode configuration.
    out = None
    last_err = None
    for single_w, deep_io in ((True, True), (True, False), (False, False)):
        try:
            out = build(single_w, deep_io)(x2, w1_t, ln_params, w2_p, b2_p)
            break
        except Exception as e:  # pragma: no cover - configuration fallback
            last_err = e
            out = None
    if out is None:
        raise last_err

    if Op != O:
        out = out[:, :O]
    return out.reshape(B, T, O)


def _reference(x, w1_t, b1, ln_g, ln_b, w2_t, b2):
    h = x @ w1_t + b1
    mu = jnp.mean(h, axis=-1, keepdims=True)
    var = jnp.mean((h - mu) ** 2, axis=-1, keepdims=True)
    hn = (h - mu) * jax.lax.rsqrt(var + LN_EPS) * ln_g + ln_b
    a = jnp.maximum(hn, 0.0)
    return a @ w2_t + b2


if __name__ == "__main__":
    # Small, module-consistent shapes: batch=2, seq=8, in_features=32, out_features=16
    B, T, H, O = 2, 8, 32, 16

    key = jax.random.PRNGKey(0)
    kx, kw1, kb1, kw2, kb2 = jax.random.split(key, 5)

    x = jax.random.normal(kx, (B, T, H), dtype=jnp.float32)

    # Deterministic parameter init (shapes from nn.Linear / LayerNorm in __init__).
    w1_t = jax.random.normal(kw1, (H, H), dtype=jnp.float32) * 0.05   # dense, stored (in, out)
    b1 = jax.random.normal(kb1, (H,), dtype=jnp.float32) * 0.05
    ln_g = jnp.ones((H,), dtype=jnp.float32)
    ln_b = jnp.zeros((H,), dtype=jnp.float32)
    w2_t = jax.random.normal(kw2, (H, O), dtype=jnp.float32) * 0.05   # out_proj, stored (in, out)
    b2 = jax.random.normal(kb2, (O,), dtype=jnp.float32) * 0.05

    logits = multiclass_head(x, w1_t, b1, ln_g, ln_b, w2_t, b2)
    jax.block_until_ready(logits)

    ref = _reference(x, w1_t, b1, ln_g, ln_b, w2_t, b2)
    assert logits.shape == (B, T, O)
    assert jnp.allclose(logits, ref, atol=1e-4, rtol=1e-4)

    print("KERNEL_OK")
</pallas_src>

<mosaic_0001>
module attributes {stable_mosaic.version = 11 : i64} {
  func.func @head_kernel(%arg0: i32, %arg1: memref<8x32xf32, #tpu.memory_space<vmem>>, %arg2: memref<32x32xf32, #tpu.memory_space<vmem>>, %arg3: memref<3x32xf32, #tpu.memory_space<vmem>>, %arg4: memref<32x128xf32, #tpu.memory_space<vmem>>, %arg5: memref<1x128xf32, #tpu.memory_space<vmem>>, %arg6: memref<8x128xf32, #tpu.memory_space<vmem>>) attributes {dimension_semantics = [#tpu.dimension_semantics<parallel>], iteration_bounds = array<i64: 2>, scalar_prefetch = 0 : i64, scratch_operands = 0 : i64, tpu.core_type = #tpu.core_type<tc>, window_params = [{transform_indices = @transform_0, window_bounds = array<i64: 8, 32>}, {pipeline_mode = #tpu.pipeline_mode<synchronous>, transform_indices = @transform_1, window_bounds = array<i64: 32, 32>}, {pipeline_mode = #tpu.pipeline_mode<synchronous>, transform_indices = @transform_2, window_bounds = array<i64: 3, 32>}, {pipeline_mode = #tpu.pipeline_mode<synchronous>, transform_indices = @transform_3, window_bounds = array<i64: 32, 128>}, {pipeline_mode = #tpu.pipeline_mode<synchronous>, transform_indices = @transform_4, window_bounds = array<i64: 1, 128>}, {transform_indices = @transform_5, window_bounds = array<i64: 8, 128>}]} {
    %c0 = arith.constant 0 : index
    %c0_0 = arith.constant 0 : index
    %0 = vector.load %arg3[%c0, %c0_0] : memref<3x32xf32, #tpu.memory_space<vmem>>, vector<3x32xf32>
    %1 = vector.extract_strided_slice %0 {offsets = [0, 0], sizes = [1, 32], strides = [1, 1]} : vector<3x32xf32> to vector<1x32xf32>
    %2 = vector.extract_strided_slice %0 {offsets = [1, 0], sizes = [1, 32], strides = [1, 1]} : vector<3x32xf32> to vector<1x32xf32>
    %3 = vector.extract_strided_slice %0 {offsets = [2, 0], sizes = [1, 32], strides = [1, 1]} : vector<3x32xf32> to vector<1x32xf32>
    %c0_1 = arith.constant 0 : index
    %c0_2 = arith.constant 0 : index
    %4 = vector.load %arg5[%c0_1, %c0_2] : memref<1x128xf32, #tpu.memory_space<vmem>>, vector<1x128xf32>
    %c0_3 = arith.constant 0 : index
    %c0_4 = arith.constant 0 : index
    %5 = vector.load %arg1[%c0_3, %c0_4] : memref<8x32xf32, #tpu.memory_space<vmem>>, vector<8x32xf32>
    %c0_5 = arith.constant 0 : index
    %c0_6 = arith.constant 0 : index
    %6 = vector.load %arg2[%c0_5, %c0_6] : memref<32x32xf32, #tpu.memory_space<vmem>>, vector<32x32xf32>
    %cst = arith.constant dense<0.000000e+00> : vector<8x32xf32>
    %7 = tpu.matmul %5, %6, %cst {dimension_numbers = #tpu.dot_dimension_numbers<[1], [0], [0], [1], [0, 0, 1, 1], [], []>} : vector<8x32xf32>, vector<32x32xf32>, vector<8x32xf32> -> vector<8x32xf32>
    %8 = vector.broadcast %1 : vector<1x32xf32> to vector<8x32xf32>
    %9 = arith.addf %7, %8 : vector<8x32xf32>
    %cst_7 = arith.constant dense<0.000000e+00> : vector<8xf32>
    %10 = vector.multi_reduction <add>, %9, %cst_7 [1] : vector<8x32xf32> to vector<8xf32>
    %11 = vector.shape_cast %10 : vector<8xf32> to vector<8x1xf32>
    %cst_8 = arith.constant 3.200000e+01 : f32
    %12 = vector.broadcast %cst_8 : f32 to vector<8x1xf32>
    %13 = arith.divf %11, %12 : vector<8x1xf32>
    %14 = vector.broadcast %13 : vector<8x1xf32> to vector<8x32xf32>
    %15 = arith.subf %9, %14 : vector<8x32xf32>
    %16 = arith.mulf %15, %15 : vector<8x32xf32>
    %cst_9 = arith.constant dense<0.000000e+00> : vector<8xf32>
    %17 = vector.multi_reduction <add>, %16, %cst_9 [1] : vector<8x32xf32> to vector<8xf32>
    %18 = vector.shape_cast %17 : vector<8xf32> to vector<8x1xf32>
    %cst_10 = arith.constant 3.200000e+01 : f32
    %19 = vector.broadcast %cst_10 : f32 to vector<8x1xf32>
    %20 = arith.divf %18, %19 : vector<8x1xf32>
    %cst_11 = arith.constant 9.99999974E-6 : f32
    %21 = vector.broadcast %cst_11 : f32 to vector<8x1xf32>
    %22 = arith.addf %20, %21 : vector<8x1xf32>
    %23 = math.rsqrt %22 : vector<8x1xf32>
    %24 = vector.broadcast %23 : vector<8x1xf32> to vector<8x32xf32>
    %25 = arith.mulf %15, %24 : vector<8x32xf32>
    %26 = vector.broadcast %2 : vector<1x32xf32> to vector<8x32xf32>
    %27 = arith.mulf %25, %26 : vector<8x32xf32>
    %28 = vector.broadcast %3 : vector<1x32xf32> to vector<8x32xf32>
    %29 = arith.addf %27, %28 : vector<8x32xf32>
    %cst_12 = arith.constant 0.000000e+00 : f32
    %30 = vector.broadcast %cst_12 : f32 to vector<8x32xf32>
    %31 = arith.maximumf %29, %30 : vector<8x32xf32>
    %c0_13 = arith.constant 0 : index
    %c0_14 = arith.constant 0 : index
    %32 = vector.load %arg4[%c0_13, %c0_14] : memref<32x128xf32, #tpu.memory_space<vmem>>, vector<32x128xf32>
    %cst_15 = arith.constant dense<0.000000e+00> : vector<8x128xf32>
    %33 = tpu.matmul %31, %32, %cst_15 {dimension_numbers = #tpu.dot_dimension_numbers<[1], [0], [0], [1], [0, 0, 1, 1], [], []>} : vector<8x32xf32>, vector<32x128xf32>, vector<8x128xf32> -> vector<8x128xf32>
    %34 = vector.broadcast %4 : vector<1x128xf32> to vector<8x128xf32>
    %35 = arith.addf %33, %34 : vector<8x128xf32>
    %c0_16 = arith.constant 0 : index
    %c0_17 = arith.constant 0 : index
    %36 = vector.load %arg6[%c0_16, %c0_17] : memref<8x128xf32, #tpu.memory_space<vmem>>, vector<8x128xf32>
    tpu.vector_store %arg6[%c0_16, %c0_17], %35 {strides = array<i32>} : memref<8x128xf32, #tpu.memory_space<vmem>>, vector<8x128xf32>,
    return
  }
  func.func @transform_0(%arg0: i32) -> (i32, i32) {
    %c0_i32 = arith.constant 0 : i32
    %c0_i32_0 = arith.constant 0 : i32
    return %arg0, %c0_i32 : i32, i32
  }
  func.func @transform_1(%arg0: i32) -> (i32, i32) {
    %c0_i32 = arith.constant 0 : i32
    %c0_i32_0 = arith.constant 0 : i32
    %c0_i32_1 = arith.constant 0 : i32
    return %c0_i32, %c0_i32_0 : i32, i32
  }
  func.func @transform_2(%arg0: i32) -> (i32, i32) {
    %c0_i32 = arith.constant 0 : i32
    %c0_i32_0 = arith.constant 0 : i32
    %c0_i32_1 = arith.constant 0 : i32
    return %c0_i32, %c0_i32_0 : i32, i32
  }
  func.func @transform_3(%arg0: i32) -> (i32, i32) {
    %c0_i32 = arith.constant 0 : i32
    %c0_i32_0 = arith.constant 0 : i32
    %c0_i32_1 = arith.constant 0 : i32
    return %c0_i32, %c0_i32_0 : i32, i32
  }
  func.func @transform_4(%arg0: i32) -> (i32, i32) {
    %c0_i32 = arith.constant 0 : i32
    %c0_i32_0 = arith.constant 0 : i32
    %c0_i32_1 = arith.constant 0 : i32
    return %c0_i32, %c0_i32_0 : i32, i32
  }
  func.func @transform_5(%arg0: i32) -> (i32, i32) {
    %c0_i32 = arith.constant 0 : i32
    %c0_i32_0 = arith.constant 0 : i32
    return %arg0, %c0_i32 : i32, i32
  }
}

module attributes {stable_mosaic.version = 11 : i64} {
  func.func @head_kernel(%arg0: i32, %arg1: memref<8x32xf32, #tpu.memory_space<vmem>>, %arg2: memref<32x32xf32, #tpu.memory_space<vmem>>, %arg3: memref<3x32xf32, #tpu.memory_space<vmem>>, %arg4: memref<32x128xf32, #tpu.memory_space<vmem>>, %arg5: memref<1x128xf32, #tpu.memory_space<vmem>>, %arg6: memref<8x128xf32, #tpu.memory_space<vmem>>) attributes {dimension_semantics = [#tpu.dimension_semantics<parallel>], iteration_bounds = array<i64: 2>, scalar_prefetch = 0 : i64, scratch_operands = 0 : i64, tpu.core_type = #tpu.core_type<tc>, window_params = [{transform_indices = @transform_0, window_bounds = array<i64: 8, 32>}, {pipeline_mode = #tpu.pipeline_mode<synchronous>, transform_indices = @transform_1, window_bounds = array<i64: 32, 32>}, {pipeline_mode = #tpu.pipeline_mode<synchronous>, transform_indices = @transform_2, window_bounds = array<i64: 3, 32>}, {pipeline_mode = #tpu.pipeline_mode<synchronous>, transform_indices = @transform_3, window_bounds = array<i64: 32, 128>}, {pipeline_mode = #tpu.pipeline_mode<synchronous>, transform_indices = @transform_4, window_bounds = array<i64: 1, 128>}, {transform_indices = @transform_5, window_bounds = array<i64: 8, 128>}]} {
    %c0 = arith.constant 0 : index
    %c0_0 = arith.constant 0 : index
    %0 = vector.load %arg3[%c0, %c0_0] : memref<3x32xf32, #tpu.memory_space<vmem>>, vector<3x32xf32>
    %1 = vector.extract_strided_slice %0 {offsets = [0, 0], sizes = [1, 32], strides = [1, 1]} : vector<3x32xf32> to vector<1x32xf32>
    %2 = vector.extract_strided_slice %0 {offsets = [1, 0], sizes = [1, 32], strides = [1, 1]} : vector<3x32xf32> to vector<1x32xf32>
    %3 = vector.extract_strided_slice %0 {offsets = [2, 0], sizes = [1, 32], strides = [1, 1]} : vector<3x32xf32> to vector<1x32xf32>
    %c0_1 = arith.constant 0 : index
    %c0_2 = arith.constant 0 : index
    %4 = vector.load %arg5[%c0_1, %c0_2] : memref<1x128xf32, #tpu.memory_space<vmem>>, vector<1x128xf32>
    %c0_3 = arith.constant 0 : index
    %c0_4 = arith.constant 0 : index
    %5 = vector.load %arg1[%c0_3, %c0_4] : memref<8x32xf32, #tpu.memory_space<vmem>>, vector<8x32xf32>
    %c0_5 = arith.constant 0 : index
    %c0_6 = arith.constant 0 : index
    %6 = vector.load %arg2[%c0_5, %c0_6] : memref<32x32xf32, #tpu.memory_space<vmem>>, vector<32x32xf32>
    %cst = arith.constant dense<0.000000e+00> : vector<8x32xf32>
    %7 = tpu.matmul %5, %6, %cst {dimension_numbers = #tpu.dot_dimension_numbers<[1], [0], [0], [1], [0, 0, 1, 1], [], []>} : vector<8x32xf32>, vector<32x32xf32>, vector<8x32xf32> -> vector<8x32xf32>
    %8 = vector.broadcast %1 : vector<1x32xf32> to vector<8x32xf32>
    %9 = arith.addf %7, %8 : vector<8x32xf32>
    %cst_7 = arith.constant dense<0.000000e+00> : vector<8xf32>
    %10 = vector.multi_reduction <add>, %9, %cst_7 [1] : vector<8x32xf32> to vector<8xf32>
    %11 = vector.shape_cast %10 : vector<8xf32> to vector<8x1xf32>
    %cst_8 = arith.constant 3.200000e+01 : f32
    %12 = vector.broadcast %cst_8 : f32 to vector<8x1xf32>
    %13 = arith.divf %11, %12 : vector<8x1xf32>
    %14 = vector.broadcast %13 : vector<8x1xf32> to vector<8x32xf32>
    %15 = arith.subf %9, %14 : vector<8x32xf32>
    %16 = arith.mulf %15, %15 : vector<8x32xf32>
    %cst_9 = arith.constant dense<0.000000e+00> : vector<8xf32>
    %17 = vector.multi_reduction <add>, %16, %cst_9 [1] : vector<8x32xf32> to vector<8xf32>
    %18 = vector.shape_cast %17 : vector<8xf32> to vector<8x1xf32>
    %cst_10 = arith.constant 3.200000e+01 : f32
    %19 = vector.broadcast %cst_10 : f32 to vector<8x1xf32>
    %20 = arith.divf %18, %19 : vector<8x1xf32>
    %cst_11 = arith.constant 9.99999974E-6 : f32
    %21 = vector.broadcast %cst_11 : f32 to vector<8x1xf32>
    %22 = arith.addf %20, %21 : vector<8x1xf32>
    %23 = math.rsqrt %22 : vector<8x1xf32>
    %24 = vector.broadcast %23 : vector<8x1xf32> to vector<8x32xf32>
    %25 = arith.mulf %15, %24 : vector<8x32xf32>
    %26 = vector.broadcast %2 : vector<1x32xf32> to vector<8x32xf32>
    %27 = arith.mulf %25, %26 : vector<8x32xf32>
    %28 = vector.broadcast %3 : vector<1x32xf32> to vector<8x32xf32>
    %29 = arith.addf %27, %28 : vector<8x32xf32>
    %cst_12 = arith.constant 0.000000e+00 : f32
    %30 = vector.broadcast %cst_12 : f32 to vector<8x32xf32>
    %31 = arith.maximumf %29, %30 : vector<8x32xf32>
    %c0_13 = arith.constant 0 : index
    %c0_14 = arith.constant 0 : index
    %32 = vector.load %arg4[%c0_13, %c0_14] : memref<32x128xf32, #tpu.memory_space<vmem>>, vector<32x128xf32>
    %cst_15 = arith.constant dense<0.000000e+00> : vector<8x128xf32>
    %33 = tpu.matmul %31, %32, %cst_15 {dimension_numbers = #tpu.dot_dimension_numbers<[1], [0], [0], [1], [0, 0, 1, 1], [], []>} : vector<8x32xf32>, vector<32x128xf32>, vector<8x128xf32> -> vector<8x128xf32>
    %34 = vector.broadcast %4 : vector<1x128xf32> to vector<8x128xf32>
    %35 = arith.addf %33, %34 : vector<8x128xf32>
    %c0_16 = arith.constant 0 : index
    %c0_17 = arith.constant 0 : index
    %36 = vector.load %arg6[%c0_16, %c0_17] : memref<8x128xf32, #tpu.memory_space<vmem>>, vector<8x128xf32>
    tpu.vector_store %arg6[%c0_16, %c0_17], %35 {strides = array<i32>} : memref<8x128xf32, #tpu.memory_space<vmem>>, vector<8x128xf32>,
    return
  }
  func.func @transform_0(%arg0: i32) -> (i32, i32) {
    %c0_i32 = arith.constant 0 : i32
    %c0_i32_0 = arith.constant 0 : i32
    return %arg0, %c0_i32 : i32, i32
  }
  func.func @transform_1(%arg0: i32) -> (i32, i32) {
    %c0_i32 = arith.constant 0 : i32
    %c0_i32_0 = arith.constant 0 : i32
    %c0_i32_1 = arith.constant 0 : i32
    return %c0_i32, %c0_i32_0 : i32, i32
  }
  func.func @transform_2(%arg0: i32) -> (i32, i32) {
    %c0_i32 = arith.constant 0 : i32
    %c0_i32_0 = arith.constant 0 : i32
    %c0_i32_1 = arith.constant 0 : i32
    return %c0_i32, %c0_i32_0 : i32, i32
  }
  func.func @transform_3(%arg0: i32) -> (i32, i32) {
    %c0_i32 = arith.constant 0 : i32
    %c0_i32_0 = arith.constant 0 : i32
    %c0_i32_1 = arith.constant 0 : i32
    return %c0_i32, %c0_i32_0 : i32, i32
  }
  func.func @transform_4(%arg0: i32) -> (i32, i32) {
    %c0_i32 = arith.constant 0 : i32
    %c0_i32_0 = arith.constant 0 : i32
    %c0_i32_1 = arith.constant 0 : i32
    return %c0_i32, %c0_i32_0 : i32, i32
  }
  func.func @transform_5(%arg0: i32) -> (i32, i32) {
    %c0_i32 = arith.constant 0 : i32
    %c0_i32_0 = arith.constant 0 : i32
    return %arg0, %c0_i32 : i32, i32
  }
}

</mosaic_0001>

<llo_original>
// kernel: tpu_custom_call.1
$region0: #{tpu_custom_call.1}
  #allocation0 [shape = 'u32[]', space=smem, size = 0x4, offset = 0x4, fixed_abs, tag = 'smem constant byte address 0x4 - core index']
  #allocation1 [shape = 'u32[144,128]{1,0:T(1,128)}', space=vmem, size = 0x12000, scoped, tag = 'internal scratch']
  %s0 = inlined_call_operand.hbm [shape: f32[16,32], index: 0, kind: input, shape index: {}]
  %s1 = inlined_call_operand.hbm [shape: f32[32,32], index: 1, kind: input, shape index: {}]
  %s2 = inlined_call_operand.vmem [shape: f32[3,32], index: 2, kind: input, shape index: {}]
  %s3 = inlined_call_operand.hbm [shape: f32[32,128], index: 3, kind: input, shape index: {}]
  %s4 = inlined_call_operand.vmem [shape: f32[1,128], index: 4, kind: input, shape index: {}]
  %s5 = inlined_call_operand.hbm [shape: f32[16,128], index: 5, kind: output, shape index: {}]
  %s6 = sld [smem:[#allocation0]]
  $region65: #{tpu_custom_call.1} parent=0
    _
  %s8 = ssub.s32 1, %s6
  %s9 = scalar_select 0, %s8, %s6
  $region1: #{tpu_custom_call.1} parent=0
    #allocation2 [shape = 'u8[8192]{0}', space=vmem, size = 0x2000, scoped, tag = 'input window, operand 0']
    #allocation3 [shape = 's32[2]{0}', space=sflag, size = 0x8, scoped, tag = 'scoped memory for tpu_custom_call.1']
    #allocation4 [shape = 's32[2]{0}', space=sflag, size = 0x8, scoped, tag = 'scoped memory for tpu_custom_call.1']
    #allocation5 [shape = 'u8[16384]{0}', space=vmem, size = 0x4000, scoped, tag = 'input window, operand 1, single buffered']
    #allocation6 [shape = 's32[1]{0}', space=sflag, size = 0x4, scoped, tag = 'scoped memory for tpu_custom_call.1']
    #allocation7 [shape = 'u8[16384]{0}', space=vmem, size = 0x4000, scoped, tag = 'input window, operand 3, single buffered']
    #allocation8 [shape = 'u8[8192]{0}', space=vmem, size = 0x2000, scoped, tag = 'output window, operand 0']
    %10 = vsyncpa [#allocation3], 0
    %s11 = scalar_lea.sflag [#allocation3], 1
    %12 = vsyncpa %s11, 0
    %13 = vsyncpa [#allocation6], 0
    %14 = vsyncpa [#allocation4], 0
    %s15 = scalar_lea.sflag [#allocation4], 1
    %16 = vsyncpa %s15, 0
    loop: start=0, step=1, limit=4
    $region2: #{tpu_custom_call.1} parent=1 // loop_pre_header
      _
    $region3: #{tpu_custom_call.1} parent=1 // loop_header
      %s18 = sphi 0, %s22
      %p19 = scmp.ge.s32.totalorder %s18, 4
      %s28 = sphi 0, %s30
      %s31 = sphi 0, %s28
      %s32 = sphi 0, %s31
      %s48 = sphi 0, %s32
      %s52 = sphi 0, %s52
      %s54 = sphi 0, %s52
      %s55 = sphi 0, %s54
      %s69 = sphi 0, %s55
      %s73 = sphi 0, %s73
      %s75 = sphi 0, %s73
      %s76 = sphi 0, %s75
      %s90 = sphi 0, %s76
      %s94 = sphi 0, %s94
      %s96 = sphi 0, %s94
      %s97 = sphi 0, %s96
      %s111 = sphi 0, %s97
      %s115 = sphi 0, %s115
      %s117 = sphi 0, %s115
      %s118 = sphi 0, %s117
      %s132 = sphi 0, %s118
      %s138 = sphi 0, %s140
      %s141 = sphi 0, %s138
      %s142 = sphi 0, %s141
      %s158 = sphi 0, %s142
    $region4: #{tpu_custom_call.1} parent=1 // loop_header_branch
      %21 = sbr.rel (%p19) target = $region8
    $region5: #{tpu_custom_call.1} parent=1 // loop_body
      %s23 = ssub.s32 %s18, 1
      %s24 = ssub.s32 %s18, 2
      %s25 = sadd.s32 %s18, 1
      %s26 = ssub.s32 %s18, %s25
      %p27 = scmp.eq.s32.totalorder %s26, 0
      %s29 = sadd.s32 %s28, 1
      %s30 = scalar_select %p27, %s28, %s29
      %p33 = pneg %p27
      %p34 = scmp.eq.s32.totalorder %s18, 1
      %p35 = por %p33, %p34
      %p36 = scmp.ne.s32.totalorder %s28, %s31
      %p37 = scmp.eq.s32.totalorder %s18, 0
      %p38 = por %p36, %p37
      %p39 = scmp.ne.s32.totalorder %s28, %s31
      %p40 = scmp.eq.s32.totalorder %s23, 1
      %p41 = por %p39, %p40
      %p42 = scmp.ne.s32.totalorder %s31, %s32
      %p43 = scmp.eq.s32.totalorder %s23, 0
      %p44 = por %p42, %p43
      %p45 = scmp.ne.s32.totalorder %s31, %s32
      %p46 = scmp.eq.s32.totalorder %s24, 1
      %p47 = por %p45, %p46
      %p49 = scmp.ne.s32.totalorder %s32, %s48
      %p50 = scmp.eq.s32.totalorder %s24, 0
      %p51 = por %p49, %p50
      %s53 = sadd.s32 %s52, 1
      %p56 = scmp.eq.s32.totalorder %s18, 1
      %p57 = scmp.ne.s32.totalorder %s52, %s54
      %p58 = scmp.eq.s32.totalorder %s18, 0
      %p59 = por %p57, %p58
      %p60 = scmp.ne.s32.totalorder %s52, %s54
      %p61 = scmp.eq.s32.totalorder %s23, 1
      %p62 = por %p60, %p61
      %p63 = scmp.ne.s32.totalorder %s54, %s55
      %p64 = scmp.eq.s32.totalorder %s23, 0
      %p65 = por %p63, %p64
      %p66 = scmp.ne.s32.totalorder %s54, %s55
      %p67 = scmp.eq.s32.totalorder %s24, 1
      %p68 = por %p66, %p67
      %p70 = scmp.ne.s32.totalorder %s55, %s69
      %p71 = scmp.eq.s32.totalorder %s24, 0
      %p72 = por %p70, %p71
      %s74 = sadd.s32 %s73, 1
      %p77 = scmp.eq.s32.totalorder %s18, 1
      %p78 = scmp.ne.s32.totalorder %s73, %s75
      %p79 = scmp.eq.s32.totalorder %s18, 0
      %p80 = por %p78, %p79
      %p81 = scmp.ne.s32.totalorder %s73, %s75
      %p82 = scmp.eq.s32.totalorder %s23, 1
      %p83 = por %p81, %p82
      %p84 = scmp.ne.s32.totalorder %s75, %s76
      %p85 = scmp.eq.s32.totalorder %s23, 0
      %p86 = por %p84, %p85
      %p87 = scmp.ne.s32.totalorder %s75, %s76
      %p88 = scmp.eq.s32.totalorder %s24, 1
      %p89 = por %p87, %p88
      %p91 = scmp.ne.s32.totalorder %s76, %s90
      %p92 = scmp.eq.s32.totalorder %s24, 0
      %p93 = por %p91, %p92
      %s95 = sadd.s32 %s94, 1
      %p98 = scmp.eq.s32.totalorder %s18, 1
      %p99 = scmp.ne.s32.totalorder %s94, %s96
      %p100 = scmp.eq.s32.totalorder %s18, 0
      %p101 = por %p99, %p100
      %p102 = scmp.ne.s32.totalorder %s94, %s96
      %p103 = scmp.eq.s32.totalorder %s23, 1
      %p104 = por %p102, %p103
      %p105 = scmp.ne.s32.totalorder %s96, %s97
      %p106 = scmp.eq.s32.totalorder %s23, 0
      %p107 = por %p105, %p106
      %p108 = scmp.ne.s32.totalorder %s96, %s97
      %p109 = scmp.eq.s32.totalorder %s24, 1
      %p110 = por %p108, %p109
      %p112 = scmp.ne.s32.totalorder %s97, %s111
      %p113 = scmp.eq.s32.totalorder %s24, 0
      %p114 = por %p112, %p113
      %s116 = sadd.s32 %s115, 1
      %p119 = scmp.eq.s32.totalorder %s18, 1
      %p120 = scmp.ne.s32.totalorder %s115, %s117
      %p121 = scmp.eq.s32.totalorder %s18, 0
      %p122 = por %p120, %p121
      %p123 = scmp.ne.s32.totalorder %s115, %s117
      %p124 = scmp.eq.s32.totalorder %s23, 1
      %p125 = por %p123, %p124
      %p126 = scmp.ne.s32.totalorder %s117, %s118
      %p127 = scmp.eq.s32.totalorder %s23, 0
      %p128 = por %p126, %p127
      %p129 = scmp.ne.s32.totalorder %s117, %s118
      %p130 = scmp.eq.s32.totalorder %s24, 1
      %p131 = por %p129, %p130
      %p133 = scmp.ne.s32.totalorder %s118, %s132
      %p134 = scmp.eq.s32.totalorder %s24, 0
      %p135 = por %p133, %p134
      %s136 = ssub.s32 %s18, %s25
      %p137 = scmp.eq.s32.totalorder %s136, 0
      %s139 = sadd.s32 %s138, 1
      %s140 = scalar_select %p137, %s138, %s139
      %p143 = pneg %p137
      %p144 = scmp.eq.s32.totalorder %s18, 1
      %p145 = por %p143, %p144
      %p146 = scmp.ne.s32.totalorder %s138, %s141
      %p147 = scmp.eq.s32.totalorder %s18, 0
      %p148 = por %p146, %p147
      %p149 = scmp.ne.s32.totalorder %s138, %s141
      %p150 = scmp.eq.s32.totalorder %s23, 1
      %p151 = por %p149, %p150
      %p152 = scmp.ne.s32.totalorder %s141, %s142
      %p153 = scmp.eq.s32.totalorder %s23, 0
      %p154 = por %p152, %p153
      %p155 = scmp.ne.s32.totalorder %s141, %s142
      %p156 = scmp.eq.s32.totalorder %s24, 1
      %p157 = por %p155, %p156
      %p159 = scmp.ne.s32.totalorder %s142, %s158
      %p160 = scmp.eq.s32.totalorder %s24, 0
      %p161 = por %p159, %p160
      %p162 = scmp.le.s32.totalorder 1, %s18
      %p163 = scmp.lt.s32.totalorder %s18, 3
      %p164 = pnand %p162, %p163
      %p165 = pneg %p164
      // Predicated region
      $region9: #{tpu_custom_call.1} parent=5 // pred_check
        _
      $region10: #{tpu_custom_call.1} parent=5 // pred_check_branch
        %167 = sbr.rel (%p164) target = $region12
      $region11: #{tpu_custom_call.1} parent=5 // pred_region
        %s168 = ssub.s32 %s18, 1
        // Predicated region
        $region13: #{tpu_custom_call.1} parent=11 // pred_check
          %p169 = pneg %p65
        $region14: #{tpu_custom_call.1} parent=11 // pred_check_branch
          %171 = sbr.rel (%p169) target = $region16
        $region15: #{tpu_custom_call.1} parent=11 // pred_region
          %s173 = ssub.s32 512, 512
          %174 = vsyncadd [#allocation6], %s173
          %s175 = sshll.u32 [#allocation5], 4
          %s176 = int_to_ptr.vmem [resolvable:$true] %s175
          %181 = dma.hbm_to_vmem [thread:$0]  %s1, 512, %s176, [#allocation6], 128, 128, 8
        $region16: #{tpu_custom_call.1} parent=11 // pred_fallthru
          _
        // Predicated region
        $region17: #{tpu_custom_call.1} parent=11 // pred_check
          %p182 = pneg %p86
        $region18: #{tpu_custom_call.1} parent=11 // pred_check_branch
          %184 = sbr.rel (%p182) target = $region20
        $region19: #{tpu_custom_call.1} parent=11 // pred_region
          _
        $region20: #{tpu_custom_call.1} parent=11 // pred_fallthru
          _
        // Predicated region
        $region21: #{tpu_custom_call.1} parent=11 // pred_check
          %p185 = pneg %p107
        $region22: #{tpu_custom_call.1} parent=11 // pred_check_branch
          %187 = sbr.rel (%p185) target = $region24
        $region23: #{tpu_custom_call.1} parent=11 // pred_region
          %s189 = ssub.s32 512, 512
          %190 = vsyncadd [#allocation6], %s189
          %s191 = sshll.u32 [#allocation7], 4
          %s192 = int_to_ptr.vmem [resolvable:$true] %s191
          %197 = dma.hbm_to_vmem [thread:$0]  %s3, 512, %s192, [#allocation6], 128, 128, 8
        $region24: #{tpu_custom_call.1} parent=11 // pred_fallthru
          _
        // Predicated region
        $region25: #{tpu_custom_call.1} parent=11 // pred_check
          %p198 = pneg %p128
        $region26: #{tpu_custom_call.1} parent=11 // pred_check_branch
          %200 = sbr.rel (%p198) target = $region28
        $region27: #{tpu_custom_call.1} parent=11 // pred_region
          _
        $region28: #{tpu_custom_call.1} parent=11 // pred_fallthru
          _
      $region12: #{tpu_custom_call.1} parent=5 // pred_fallthru
        _
      %p201 = scmp.lt.s32.totalorder %s18, 2
      // Predicated region
      $region29: #{tpu_custom_call.1} parent=5 // pred_check
        %p202 = pneg %p201
      $region30: #{tpu_custom_call.1} parent=5 // pred_check_branch
        %204 = sbr.rel (%p202) target = $region32
      $region31: #{tpu_custom_call.1} parent=5 // pred_region
        // Predicated region
        $region33: #{tpu_custom_call.1} parent=31 // pred_check
          %p205 = pneg %p38
        $region34: #{tpu_custom_call.1} parent=31 // pred_check_branch
          %207 = sbr.rel (%p205) target = $region36
        $region35: #{tpu_custom_call.1} parent=31 // pred_region
          %s208 = sand.u32 %s28, 1
          %s209 = scalar_lea.sflag [#allocation3], %s208
          %s210 = sand.u32 %s28, 1
          %s211 = smul.addr %s210, 8
          %s212 = scalar_lea.vmem [#allocation2], %s211
          %s214 = ssub.s32 128, 128
          %215 = vsyncadd %s209, %s214
          %s216 = smul.addr %s18, 128
          %s217 = scalar_lea.hbm %s0, %s216
          %s219 = sshll.u32 %s212, 4
          %s220 = int_to_ptr.vmem [resolvable:$true] %s219
          %222 = dma.hbm_to_vmem [thread:$0]  %s217, 128, %s220, %s209
        $region36: #{tpu_custom_call.1} parent=31 // pred_fallthru
          _
      $region32: #{tpu_custom_call.1} parent=5 // pred_fallthru
        _
      %p223 = scmp.le.s32.totalorder 1, %s18
      %p224 = scmp.lt.s32.totalorder %s18, 3
      %p225 = pnand %p223, %p224
      %p226 = pneg %p225
      // Predicated region
      $region37: #{tpu_custom_call.1} parent=5 // pred_check
        _
      $region38: #{tpu_custom_call.1} parent=5 // pred_check_branch
        %228 = sbr.rel (%p225) target = $region40
      $region39: #{tpu_custom_call.1} parent=5 // pred_region
        %s229 = ssub.s32 %s18, 1
        %s230 = sand.u32 %s31, 1
        %s231 = scalar_lea.sflag [#allocation3], %s230
        %s232 = sand.u32 %s31, 1
        %s233 = smul.addr %s232, 8
        %s234 = scalar_lea.vmem [#allocation2], %s233
        // Predicated region
        $region41: #{tpu_custom_call.1} parent=39 // pred_check
          %p235 = pneg %p44
        $region42: #{tpu_custom_call.1} parent=39 // pred_check_branch
          %237 = sbr.rel (%p235) target = $region44
        $region43: #{tpu_custom_call.1} parent=39 // pred_region
          %238 = dma.done %s231, 128
        $region44: #{tpu_custom_call.1} parent=39 // pred_fallthru
          _
        // Predicated region
        $region45: #{tpu_custom_call.1} parent=39 // pred_check
          %p239 = pneg %p65
        $region46: #{tpu_custom_call.1} parent=39 // pred_check_branch
          %241 = sbr.rel (%p239) target = $region48
        $region47: #{tpu_custom_call.1} parent=39 // pred_region
          %242 = dma.done [#allocation6], 512
        $region48: #{tpu_custom_call.1} parent=39 // pred_fallthru
          _
        // Predicated region
        $region49: #{tpu_custom_call.1} parent=39 // pred_check
          %p243 = pneg %p107
        $region50: #{tpu_custom_call.1} parent=39 // pred_check_branch
          %245 = sbr.rel (%p243) target = $region52
        $region51: #{tpu_custom_call.1} parent=39 // pred_region
          %246 = dma.done [#allocation6], 512
        $region52: #{tpu_custom_call.1} parent=39 // pred_fallthru
          _
        %s247 = sand.u32 %s31, 1
        %s248 = scalar_lea.sflag [#allocation3], %s247
        %s249 = sand.u32 %s31, 1
        %s250 = smul.addr %s249, 8
        %s251 = scalar_lea.vmem [#allocation2], %s250
        %p252 = pneg %p44
        %p253 = pneg %p41
        %p254 = pneg %p65
        %p255 = pneg %p62
        %p256 = pneg %p86
        %p257 = pneg %p83
        %p258 = pneg %p107
        %p259 = pneg %p104
        %p260 = pneg %p128
        %p261 = pneg %p125
        %p262 = pneg %p154
        %p263 = pneg %p151
        %s264 = sand.u32 %s141, 1
        %s265 = scalar_lea.sflag [#allocation4], %s264
        %s266 = sand.u32 %s141, 1
        %s267 = smul.addr %s266, 8
        %s268 = scalar_lea.vmem [#allocation8], %s267
        %v269 = vld [vmem:[%s2] sm:$0x7]
        %v270 = vld [vmem:[%s4] sm:$0x1]
        %v271 = vld [vmem:[%s234] sm:$0xff]
        %v272 = vld [vmem:[#allocation5] sm:$0xff]
        %v273 = vld [vmem:[#allocation5 + $0x8] sm:$0xff]
        %v274 = vld [vmem:[#allocation5 + $0x10] sm:$0xff]
        %v275 = vld [vmem:[#allocation5 + $0x18] sm:$0xff]
        %v276 = vlaneseq
        %v277 = vshrl.u32 %v276, 7
        %v278 = vsub.s32 0, %v277
        %v279 = vrot.slane %v269, %v278
        %vm280 = vcmask 261120
        %v282 = vsel %vm280, %v271, 0
        %284 = vmatprep.subr.mxu0 0.0
        %285 = vmatpush1.msra.mxu0 %v272
        %286 = vmatprep.subr.mxu0 0.0
        %287 = vmatpush1.msra.mxu0 %v273
        %288 = vmatprep.subr.mxu0 0.0
        %289 = vmatpush1.msra.mxu0 %v274
        %290 = vmatprep.subr.mxu0 0.0
        %291 = vmatpush1.msra.mxu0 %v275
        %292 = vmatprep.subr.mxu0 0.0
        %293 = vmatpush1.msra.mxu0 0.0
        %294 = vmatprep.subr.mxu0 0.0
        %295 = vmatpush1.msra.mxu0 0.0
        %296 = vmatprep.subr.mxu0 0.0
        %297 = vmatpush1.msra.mxu0 0.0
        %298 = vmatprep.subr.mxu0 0.0
        %299 = vmatpush1.msra.mxu0 0.0
        %300 = vmatprep.subr.mxu0 0.0
        %301 = vmatpush1.msra.mxu0 0.0
        %302 = vmatprep.subr.mxu0 0.0
        %303 = vmatpush1.msra.mxu0 0.0
        %304 = vmatprep.subr.mxu0 0.0
        %305 = vmatpush1.msra.mxu0 0.0
        %306 = vmatprep.subr.mxu0 0.0
        %307 = vmatpush1.msra.mxu0 0.0
        %308 = vmatprep.subr.mxu0 0.0
        %309 = vmatpush1.msra.mxu0 0.0
        %310 = vmatprep.subr.mxu0 0.0
        %311 = vmatpush1.msra.mxu0 0.0
        %312 = vmatprep.subr.mxu0 0.0
        %313 = vmatpush1.msra.mxu0 0.0
        %314 = vmatprep.subr.mxu0 0.0
        %315 = vmatpush1.msra.mxu0 0.0
        %316 = vmatprep.subr.mxu0 0.0
        %317 = vmatpush1.msra.mxu0 0.0
        %318 = vmatprep.subr.mxu0 0.0
        %319 = vmatpush1.msra.mxu0 0.0
        %320 = vmatprep.subr.mxu0 0.0
        %321 = vmatpush1.msra.mxu0 0.0
        %322 = vmatprep.subr.mxu0 0.0
        %323 = vmatpush1.msra.mxu0 0.0
        %324 = vmatprep.subr.mxu0 0.0
        %325 = vmatpush1.msra.mxu0 0.0
        %326 = vmatprep.subr.mxu0 0.0
        %327 = vmatpush1.msra.mxu0 0.0
        %328 = vmatprep.subr.mxu0 0.0
        %329 = vmatpush1.msra.mxu0 0.0
        %330 = vmatprep.subr.mxu0 0.0
        %331 = vmatpush1.msra.mxu0 0.0
        %332 = vmatprep.subr.mxu0 0.0
        %333 = vmatpush1.msra.mxu0 0.0
        %334 = vmatprep.subr.mxu0 0.0
        %335 = vmatpush1.msra.mxu0 0.0
        %336 = vmatprep.subr.mxu0 0.0
        %337 = vmatpush1.msra.mxu0 0.0
        %338 = vmatprep.subr.mxu0 0.0
        %339 = vmatpush1.msra.mxu0 0.0
        %340 = vmatprep.subr.mxu0 0.0
        %341 = vmatpush1.msra.mxu0 0.0
        %342 = vmatprep.subr.mxu0 0.0
        %343 = vmatpush1.msra.mxu0 0.0
        %344 = vmatprep.subr.mxu0 0.0
        %345 = vmatpush1.msra.mxu0 0.0
        %346 = vmatprep.subr.mxu0 0.0
        %347 = vmatpush1.msra.mxu0 0.0
        %348 = vmatprep.mubr.f32.mxu0 0.0
        %349 = vmatmul.mubr.f32.gmra.mrb[0].mxu0 %v282
        %v350 = vpop.f32.mrb[0].mxu0
        %v351 = vadd.f32 %v279, %v350
        %v352 = vpop.f32.mrb[0].mxu0
        %353 = vdwg.mxu0
        %v354 = vsel %vm280, %v351, 0.0
        %355 = vadd.xlane.f32.xlu0 %v354
        %v356 = vpop.xlane.xlu0 %355
        %v357 = vrcp.pop 32.0
        %v358 = vmul.f32 %v356, %v357
        %v359 = vsub.f32 %v351, %v358
        %v360 = vmul.f32 %v359, %v359
        %v361 = vsel %vm280, %v360, 0.0
        %362 = vadd.xlane.f32.xlu0 %v361
        %v363 = vpop.xlane.xlu0 %362
        %v364 = vmul.f32 %v363, %v357
        %v365 = vadd.f32 %v364, 1e-05
        %v366 = vrsqrt.pop %v365
        %v367 = vmul.f32 %v359, %v366
        %v368 = vlaneseq
        %v369 = vshrl.u32 %v368, 7
        %v370 = vsub.s32 1, %v369
        %v371 = vrot.slane %v269, %v370
        %v372 = vmul.f32 %v367, %v371
        %v373 = vlaneseq
        %v374 = vshrl.u32 %v373, 7
        %v375 = vsub.s32 2, %v374
        %v376 = vrot.slane %v269, %v375
        %v377 = vadd.f32 %v372, %v376
        %v378 = vmax.f32 %v377, 0.0
        %v379 = vld [vmem:[#allocation7] sm:$0xff]
        %v380 = vld [vmem:[#allocation7 + $0x8] sm:$0xff]
        %v381 = vld [vmem:[#allocation7 + $0x10] sm:$0xff]
        %v382 = vld [vmem:[#allocation7 + $0x18] sm:$0xff]
        %v384 = vlaneseq
        %v385 = vshrl.u32 %v384, 7
        %v386 = vsub.s32 0, %v385
        %v387 = vrot.slane %v270, %v386
        %v390 = vsel %vm280, %v378, 0
        %392 = vmatprep.subr.mxu0 0.0
        %393 = vmatpush1.msra.mxu0 %v379
        %394 = vmatprep.subr.mxu0 0.0
        %395 = vmatpush1.msra.mxu0 %v380
        %396 = vmatprep.subr.mxu0 0.0
        %397 = vmatpush1.msra.mxu0 %v381
        %398 = vmatprep.subr.mxu0 0.0
        %399 = vmatpush1.msra.mxu0 %v382
        %400 = vmatprep.subr.mxu0 0.0
        %401 = vmatpush1.msra.mxu0 0.0
        %402 = vmatprep.subr.mxu0 0.0
        %403 = vmatpush1.msra.mxu0 0.0
        %404 = vmatprep.subr.mxu0 0.0
        %405 = vmatpush1.msra.mxu0 0.0
        %406 = vmatprep.subr.mxu0 0.0
        %407 = vmatpush1.msra.mxu0 0.0
        %408 = vmatprep.subr.mxu0 0.0
        %409 = vmatpush1.msra.mxu0 0.0
        %410 = vmatprep.subr.mxu0 0.0
        %411 = vmatpush1.msra.mxu0 0.0
        %412 = vmatprep.subr.mxu0 0.0
        %413 = vmatpush1.msra.mxu0 0.0
        %414 = vmatprep.subr.mxu0 0.0
        %415 = vmatpush1.msra.mxu0 0.0
        %416 = vmatprep.subr.mxu0 0.0
        %417 = vmatpush1.msra.mxu0 0.0
        %418 = vmatprep.subr.mxu0 0.0
        %419 = vmatpush1.msra.mxu0 0.0
        %420 = vmatprep.subr.mxu0 0.0
        %421 = vmatpush1.msra.mxu0 0.0
        %422 = vmatprep.subr.mxu0 0.0
        %423 = vmatpush1.msra.mxu0 0.0
        %424 = vmatprep.subr.mxu0 0.0
        %425 = vmatpush1.msra.mxu0 0.0
        %426 = vmatprep.subr.mxu0 0.0
        %427 = vmatpush1.msra.mxu0 0.0
        %428 = vmatprep.subr.mxu0 0.0
        %429 = vmatpush1.msra.mxu0 0.0
        %430 = vmatprep.subr.mxu0 0.0
        %431 = vmatpush1.msra.mxu0 0.0
        %432 = vmatprep.subr.mxu0 0.0
        %433 = vmatpush1.msra.mxu0 0.0
        %434 = vmatprep.subr.mxu0 0.0
        %435 = vmatpush1.msra.mxu0 0.0
        %436 = vmatprep.subr.mxu0 0.0
        %437 = vmatpush1.msra.mxu0 0.0
        %438 = vmatprep.subr.mxu0 0.0
        %439 = vmatpush1.msra.mxu0 0.0
        %440 = vmatprep.subr.mxu0 0.0
        %441 = vmatpush1.msra.mxu0 0.0
        %442 = vmatprep.subr.mxu0 0.0
        %443 = vmatpush1.msra.mxu0 0.0
        %444 = vmatprep.subr.mxu0 0.0
        %445 = vmatpush1.msra.mxu0 0.0
        %446 = vmatprep.subr.mxu0 0.0
        %447 = vmatpush1.msra.mxu0 0.0
        %448 = vmatprep.subr.mxu0 0.0
        %449 = vmatpush1.msra.mxu0 0.0
        %450 = vmatprep.subr.mxu0 0.0
        %451 = vmatpush1.msra.mxu0 0.0
        %452 = vmatprep.subr.mxu0 0.0
        %453 = vmatpush1.msra.mxu0 0.0
        %454 = vmatprep.subr.mxu0 0.0
        %455 = vmatpush1.msra.mxu0 0.0
        %456 = vmatprep.mubr.f32.mxu0 0.0
        %457 = vmatmul.mubr.f32.gmra.mrb[0].mxu0 %v390
        %v458 = vpop.f32.mrb[0].mxu0
        %v459 = vadd.f32 %v387, %v458
        %v460 = vpop.f32.mrb[0].mxu0
        %461 = vdwg.mxu0
        %462 = vst [vmem:[%s268] sm:$0xff] %v459
        %s463 = sand.u32 %s141, 1
        %s464 = scalar_lea.sflag [#allocation4], %s463
        %s465 = sand.u32 %s141, 1
        %s466 = smul.addr %s465, 8
        %s467 = scalar_lea.vmem [#allocation8], %s466
        // Predicated region
        $region53: #{tpu_custom_call.1} parent=39 // pred_check
          %p468 = pneg %p151
        $region54: #{tpu_custom_call.1} parent=39 // pred_check_branch
          %470 = sbr.rel (%p468) target = $region56
        $region55: #{tpu_custom_call.1} parent=39 // pred_region
          %s472 = ssub.s32 128, 128
          %473 = vsyncadd %s464, %s472
          %s474 = smul.addr %s23, 128
          %s475 = scalar_lea.hbm %s5, %s474
          %s477 = sshll.u32 %s467, 4
          %s478 = int_to_ptr.vmem [resolvable:$true] %s477
          %480 = dma.vmem_to_hbm [thread:$0]  %s478, 128, %s475, %s464
        $region56: #{tpu_custom_call.1} parent=39 // pred_fallthru
          _
      $region40: #{tpu_custom_call.1} parent=5 // pred_fallthru
        _
      %p481 = scmp.le.s32.totalorder 2, %s18
      // Predicated region
      $region57: #{tpu_custom_call.1} parent=5 // pred_check
        %p482 = pneg %p481
      $region58: #{tpu_custom_call.1} parent=5 // pred_check_branch
        %484 = sbr.rel (%p482) target = $region60
      $region59: #{tpu_custom_call.1} parent=5 // pred_region
        %s485 = ssub.s32 %s18, 2
        // Predicated region
        $region61: #{tpu_custom_call.1} parent=59 // pred_check
          %p486 = pneg %p157
        $region62: #{tpu_custom_call.1} parent=59 // pred_check_branch
          %488 = sbr.rel (%p486) target = $region64
        $region63: #{tpu_custom_call.1} parent=59 // pred_region
          %s489 = sand.u32 %s142, 1
          %s490 = scalar_lea.sflag [#allocation4], %s489
          %s491 = sand.u32 %s142, 1
          %s492 = smul.addr %s491, 8
          %s493 = scalar_lea.vmem [#allocation8], %s492
          %494 = dma.done %s490, 128
        $region64: #{tpu_custom_call.1} parent=59 // pred_fallthru
          _
      $region60: #{tpu_custom_call.1} parent=5 // pred_fallthru
        _
    $region6: #{tpu_custom_call.1} parent=1 // loop_footer
      %s22 = sadd.s32 1, %s18
    $region7: #{tpu_custom_call.1} parent=1 // loop_footer_branch
      %17 = sbr.rel target = $region3
    $region8: #{tpu_custom_call.1} parent=1 // loop_exit
      _
    %495 = vsyncpa [#allocation3], 1
    %s496 = scalar_lea.sflag [#allocation3], 1
    %497 = vsyncpa %s496, 1
    %498 = vsyncpa [#allocation6], 1
    %499 = vsyncpa [#allocation4], 1
    %s500 = scalar_lea.sflag [#allocation4], 1
    %501 = vsyncpa %s500, 1

// kernel: tpu_custom_call.1
$region0: #{tpu_custom_call.1}
  #allocation0 [shape = 'u32[]', space=smem, size = 0x4, offset = 0x4, fixed_abs, tag = 'smem constant byte address 0x4 - core index']
  #allocation1 [shape = 'u32[144,128]{1,0:T(1,128)}', space=vmem, size = 0x12000, scoped, tag = 'internal scratch']
  %s0 = inlined_call_operand.hbm [shape: f32[16,32], index: 0, kind: input, shape index: {}]
  %s1 = inlined_call_operand.hbm [shape: f32[32,32], index: 1, kind: input, shape index: {}]
  %s2 = inlined_call_operand.vmem [shape: f32[3,32], index: 2, kind: input, shape index: {}]
  %s3 = inlined_call_operand.hbm [shape: f32[32,128], index: 3, kind: input, shape index: {}]
  %s4 = inlined_call_operand.vmem [shape: f32[1,128], index: 4, kind: input, shape index: {}]
  %s5 = inlined_call_operand.hbm [shape: f32[16,128], index: 5, kind: output, shape index: {}]
  %s6 = sld [smem:[#allocation0]]
  $region65: #{tpu_custom_call.1} parent=0
    _
  %s8 = ssub.s32 1, %s6
  %s9 = scalar_select 0, %s8, %s6
  $region1: #{tpu_custom_call.1} parent=0
    #allocation2 [shape = 'u8[8192]{0}', space=vmem, size = 0x2000, scoped, tag = 'input window, operand 0']
    #allocation3 [shape = 's32[2]{0}', space=sflag, size = 0x8, scoped, tag = 'scoped memory for tpu_custom_call.1']
    #allocation4 [shape = 's32[2]{0}', space=sflag, size = 0x8, scoped, tag = 'scoped memory for tpu_custom_call.1']
    #allocation5 [shape = 'u8[16384]{0}', space=vmem, size = 0x4000, scoped, tag = 'input window, operand 1, single buffered']
    #allocation6 [shape = 's32[1]{0}', space=sflag, size = 0x4, scoped, tag = 'scoped memory for tpu_custom_call.1']
    #allocation7 [shape = 'u8[16384]{0}', space=vmem, size = 0x4000, scoped, tag = 'input window, operand 3, single buffered']
    #allocation8 [shape = 'u8[8192]{0}', space=vmem, size = 0x2000, scoped, tag = 'output window, operand 0']
    %10 = vsyncpa [#allocation3], 0
    %s11 = scalar_lea.sflag [#allocation3], 1
    %12 = vsyncpa %s11, 0
    %13 = vsyncpa [#allocation6], 0
    %14 = vsyncpa [#allocation4], 0
    %s15 = scalar_lea.sflag [#allocation4], 1
    %16 = vsyncpa %s15, 0
    loop: start=0, step=1, limit=4
    $region2: #{tpu_custom_call.1} parent=1 // loop_pre_header
      _
    $region3: #{tpu_custom_call.1} parent=1 // loop_header
      %s18 = sphi 0, %s22
      %p19 = scmp.ge.s32.totalorder %s18, 4
      %s28 = sphi 0, %s30
      %s31 = sphi 0, %s28
      %s32 = sphi 0, %s31
      %s48 = sphi 0, %s32
      %s52 = sphi 0, %s52
      %s54 = sphi 0, %s52
      %s55 = sphi 0, %s54
      %s69 = sphi 0, %s55
      %s73 = sphi 0, %s73
      %s75 = sphi 0, %s73
      %s76 = sphi 0, %s75
      %s90 = sphi 0, %s76
      %s94 = sphi 0, %s94
      %s96 = sphi 0, %s94
      %s97 = sphi 0, %s96
      %s111 = sphi 0, %s97
      %s115 = sphi 0, %s115
      %s117 = sphi 0, %s115
      %s118 = sphi 0, %s117
      %s132 = sphi 0, %s118
      %s138 = sphi 0, %s140
      %s141 = sphi 0, %s138
      %s142 = sphi 0, %s141
      %s158 = sphi 0, %s142
    $region4: #{tpu_custom_call.1} parent=1 // loop_header_branch
      %21 = sbr.rel (%p19) target = $region8
    $region5: #{tpu_custom_call.1} parent=1 // loop_body
      %s23 = ssub.s32 %s18, 1
      %s24 = ssub.s32 %s18, 2
      %s25 = sadd.s32 %s18, 1
      %s26 = ssub.s32 %s18, %s25
      %p27 = scmp.eq.s32.totalorder %s26, 0
      %s29 = sadd.s32 %s28, 1
      %s30 = scalar_select %p27, %s28, %s29
      %p33 = pneg %p27
      %p34 = scmp.eq.s32.totalorder %s18, 1
      %p35 = por %p33, %p34
      %p36 = scmp.ne.s32.totalorder %s28, %s31
      %p37 = scmp.eq.s32.totalorder %s18, 0
      %p38 = por %p36, %p37
      %p39 = scmp.ne.s32.totalorder %s28, %s31
      %p40 = scmp.eq.s32.totalorder %s23, 1
      %p41 = por %p39, %p40
      %p42 = scmp.ne.s32.totalorder %s31, %s32
      %p43 = scmp.eq.s32.totalorder %s23, 0
      %p44 = por %p42, %p43
      %p45 = scmp.ne.s32.totalorder %s31, %s32
      %p46 = scmp.eq.s32.totalorder %s24, 1
      %p47 = por %p45, %p46
      %p49 = scmp.ne.s32.totalorder %s32, %s48
      %p50 = scmp.eq.s32.totalorder %s24, 0
      %p51 = por %p49, %p50
      %s53 = sadd.s32 %s52, 1
      %p56 = scmp.eq.s32.totalorder %s18, 1
      %p57 = scmp.ne.s32.totalorder %s52, %s54
      %p58 = scmp.eq.s32.totalorder %s18, 0
      %p59 = por %p57, %p58
      %p60 = scmp.ne.s32.totalorder %s52, %s54
      %p61 = scmp.eq.s32.totalorder %s23, 1
      %p62 = por %p60, %p61
      %p63 = scmp.ne.s32.totalorder %s54, %s55
      %p64 = scmp.eq.s32.totalorder %s23, 0
      %p65 = por %p63, %p64
      %p66 = scmp.ne.s32.totalorder %s54, %s55
      %p67 = scmp.eq.s32.totalorder %s24, 1
      %p68 = por %p66, %p67
      %p70 = scmp.ne.s32.totalorder %s55, %s69
      %p71 = scmp.eq.s32.totalorder %s24, 0
      %p72 = por %p70, %p71
      %s74 = sadd.s32 %s73, 1
      %p77 = scmp.eq.s32.totalorder %s18, 1
      %p78 = scmp.ne.s32.totalorder %s73, %s75
      %p79 = scmp.eq.s32.totalorder %s18, 0
      %p80 = por %p78, %p79
      %p81 = scmp.ne.s32.totalorder %s73, %s75
      %p82 = scmp.eq.s32.totalorder %s23, 1
      %p83 = por %p81, %p82
      %p84 = scmp.ne.s32.totalorder %s75, %s76
      %p85 = scmp.eq.s32.totalorder %s23, 0
      %p86 = por %p84, %p85
      %p87 = scmp.ne.s32.totalorder %s75, %s76
      %p88 = scmp.eq.s32.totalorder %s24, 1
      %p89 = por %p87, %p88
      %p91 = scmp.ne.s32.totalorder %s76, %s90
      %p92 = scmp.eq.s32.totalorder %s24, 0
      %p93 = por %p91, %p92
      %s95 = sadd.s32 %s94, 1
      %p98 = scmp.eq.s32.totalorder %s18, 1
      %p99 = scmp.ne.s32.totalorder %s94, %s96
      %p100 = scmp.eq.s32.totalorder %s18, 0
      %p101 = por %p99, %p100
      %p102 = scmp.ne.s32.totalorder %s94, %s96
      %p103 = scmp.eq.s32.totalorder %s23, 1
      %p104 = por %p102, %p103
      %p105 = scmp.ne.s32.totalorder %s96, %s97
      %p106 = scmp.eq.s32.totalorder %s23, 0
      %p107 = por %p105, %p106
      %p108 = scmp.ne.s32.totalorder %s96, %s97
      %p109 = scmp.eq.s32.totalorder %s24, 1
      %p110 = por %p108, %p109
      %p112 = scmp.ne.s32.totalorder %s97, %s111
      %p113 = scmp.eq.s32.totalorder %s24, 0
      %p114 = por %p112, %p113
      %s116 = sadd.s32 %s115, 1
      %p119 = scmp.eq.s32.totalorder %s18, 1
      %p120 = scmp.ne.s32.totalorder %s115, %s117
      %p121 = scmp.eq.s32.totalorder %s18, 0
      %p122 = por %p120, %p121
      %p123 = scmp.ne.s32.totalorder %s115, %s117
      %p124 = scmp.eq.s32.totalorder %s23, 1
      %p125 = por %p123, %p124
      %p126 = scmp.ne.s32.totalorder %s117, %s118
      %p127 = scmp.eq.s32.totalorder %s23, 0
      %p128 = por %p126, %p127
      %p129 = scmp.ne.s32.totalorder %s117, %s118
      %p130 = scmp.eq.s32.totalorder %s24, 1
      %p131 = por %p129, %p130
      %p133 = scmp.ne.s32.totalorder %s118, %s132
      %p134 = scmp.eq.s32.totalorder %s24, 0
      %p135 = por %p133, %p134
      %s136 = ssub.s32 %s18, %s25
      %p137 = scmp.eq.s32.totalorder %s136, 0
      %s139 = sadd.s32 %s138, 1
      %s140 = scalar_select %p137, %s138, %s139
      %p143 = pneg %p137
      %p144 = scmp.eq.s32.totalorder %s18, 1
      %p145 = por %p143, %p144
      %p146 = scmp.ne.s32.totalorder %s138, %s141
      %p147 = scmp.eq.s32.totalorder %s18, 0
      %p148 = por %p146, %p147
      %p149 = scmp.ne.s32.totalorder %s138, %s141
      %p150 = scmp.eq.s32.totalorder %s23, 1
      %p151 = por %p149, %p150
      %p152 = scmp.ne.s32.totalorder %s141, %s142
      %p153 = scmp.eq.s32.totalorder %s23, 0
      %p154 = por %p152, %p153
      %p155 = scmp.ne.s32.totalorder %s141, %s142
      %p156 = scmp.eq.s32.totalorder %s24, 1
      %p157 = por %p155, %p156
      %p159 = scmp.ne.s32.totalorder %s142, %s158
      %p160 = scmp.eq.s32.totalorder %s24, 0
      %p161 = por %p159, %p160
      %p162 = scmp.le.s32.totalorder 1, %s18
      %p163 = scmp.lt.s32.totalorder %s18, 3
      %p164 = pnand %p162, %p163
      %p165 = pneg %p164
      // Predicated region
      $region9: #{tpu_custom_call.1} parent=5 // pred_check
        _
      $region10: #{tpu_custom_call.1} parent=5 // pred_check_branch
        %167 = sbr.rel (%p164) target = $region12
      $region11: #{tpu_custom_call.1} parent=5 // pred_region
        %s168 = ssub.s32 %s18, 1
        // Predicated region
        $region13: #{tpu_custom_call.1} parent=11 // pred_check
          %p169 = pneg %p65
        $region14: #{tpu_custom_call.1} parent=11 // pred_check_branch
          %171 = sbr.rel (%p169) target = $region16
        $region15: #{tpu_custom_call.1} parent=11 // pred_region
          %s173 = ssub.s32 512, 512
          %174 = vsyncadd [#allocation6], %s173
          %s175 = sshll.u32 [#allocation5], 4
          %s176 = int_to_ptr.vmem [resolvable:$true] %s175
          %181 = dma.hbm_to_vmem [thread:$0]  %s1, 512, %s176, [#allocation6], 128, 128, 8
        $region16: #{tpu_custom_call.1} parent=11 // pred_fallthru
          _
        // Predicated region
        $region17: #{tpu_custom_call.1} parent=11 // pred_check
          %p182 = pneg %p86
        $region18: #{tpu_custom_call.1} parent=11 // pred_check_branch
          %184 = sbr.rel (%p182) target = $region20
        $region19: #{tpu_custom_call.1} parent=11 // pred_region
          _
        $region20: #{tpu_custom_call.1} parent=11 // pred_fallthru
          _
        // Predicated region
        $region21: #{tpu_custom_call.1} parent=11 // pred_check
          %p185 = pneg %p107
        $region22: #{tpu_custom_call.1} parent=11 // pred_check_branch
          %187 = sbr.rel (%p185) target = $region24
        $region23: #{tpu_custom_call.1} parent=11 // pred_region
          %s189 = ssub.s32 512, 512
          %190 = vsyncadd [#allocation6], %s189
          %s191 = sshll.u32 [#allocation7], 4
          %s192 = int_to_ptr.vmem [resolvable:$true] %s191
          %197 = dma.hbm_to_vmem [thread:$0]  %s3, 512, %s192, [#allocation6], 128, 128, 8
        $region24: #{tpu_custom_call.1} parent=11 // pred_fallthru
          _
        // Predicated region
        $region25: #{tpu_custom_call.1} parent=11 // pred_check
          %p198 = pneg %p128
        $region26: #{tpu_custom_call.1} parent=11 // pred_check_branch
          %200 = sbr.rel (%p198) target = $region28
        $region27: #{tpu_custom_call.1} parent=11 // pred_region
          _
        $region28: #{tpu_custom_call.1} parent=11 // pred_fallthru
          _
      $region12: #{tpu_custom_call.1} parent=5 // pred_fallthru
        _
      %p201 = scmp.lt.s32.totalorder %s18, 2
      // Predicated region
      $region29: #{tpu_custom_call.1} parent=5 // pred_check
        %p202 = pneg %p201
      $region30: #{tpu_custom_call.1} parent=5 // pred_check_branch
        %204 = sbr.rel (%p202) target = $region32
      $region31: #{tpu_custom_call.1} parent=5 // pred_region
        // Predicated region
        $region33: #{tpu_custom_call.1} parent=31 // pred_check
          %p205 = pneg %p38
        $region34: #{tpu_custom_call.1} parent=31 // pred_check_branch
          %207 = sbr.rel (%p205) target = $region36
        $region35: #{tpu_custom_call.1} parent=31 // pred_region
          %s208 = sand.u32 %s28, 1
          %s209 = scalar_lea.sflag [#allocation3], %s208
          %s210 = sand.u32 %s28, 1
          %s211 = smul.addr %s210, 8
          %s212 = scalar_lea.vmem [#allocation2], %s211
          %s214 = ssub.s32 128, 128
          %215 = vsyncadd %s209, %s214
          %s216 = smul.addr %s18, 128
          %s217 = scalar_lea.hbm %s0, %s216
          %s219 = sshll.u32 %s212, 4
          %s220 = int_to_ptr.vmem [resolvable:$true] %s219
          %222 = dma.hbm_to_vmem [thread:$0]  %s217, 128, %s220, %s209
        $region36: #{tpu_custom_call.1} parent=31 // pred_fallthru
          _
      $region32: #{tpu_custom_call.1} parent=5 // pred_fallthru
        _
      %p223 = scmp.le.s32.totalorder 1, %s18
      %p224 = scmp.lt.s32.totalorder %s18, 3
      %p225 = pnand %p223, %p224
      %p226 = pneg %p225
      // Predicated region
      $region37: #{tpu_custom_call.1} parent=5 // pred_check
        _
      $region38: #{tpu_custom_call.1} parent=5 // pred_check_branch
        %228 = sbr.rel (%p225) target = $region40
      $region39: #{tpu_custom_call.1} parent=5 // pred_region
        %s229 = ssub.s32 %s18, 1
        %s230 = sand.u32 %s31, 1
        %s231 = scalar_lea.sflag [#allocation3], %s230
        %s232 = sand.u32 %s31, 1
        %s233 = smul.addr %s232, 8
        %s234 = scalar_lea.vmem [#allocation2], %s233
        // Predicated region
        $region41: #{tpu_custom_call.1} parent=39 // pred_check
          %p235 = pneg %p44
        $region42: #{tpu_custom_call.1} parent=39 // pred_check_branch
          %237 = sbr.rel (%p235) target = $region44
        $region43: #{tpu_custom_call.1} parent=39 // pred_region
          %238 = dma.done %s231, 128
        $region44: #{tpu_custom_call.1} parent=39 // pred_fallthru
          _
        // Predicated region
        $region45: #{tpu_custom_call.1} parent=39 // pred_check
          %p239 = pneg %p65
        $region46: #{tpu_custom_call.1} parent=39 // pred_check_branch
          %241 = sbr.rel (%p239) target = $region48
        $region47: #{tpu_custom_call.1} parent=39 // pred_region
          %242 = dma.done [#allocation6], 512
        $region48: #{tpu_custom_call.1} parent=39 // pred_fallthru
          _
        // Predicated region
        $region49: #{tpu_custom_call.1} parent=39 // pred_check
          %p243 = pneg %p107
        $region50: #{tpu_custom_call.1} parent=39 // pred_check_branch
          %245 = sbr.rel (%p243) target = $region52
        $region51: #{tpu_custom_call.1} parent=39 // pred_region
          %246 = dma.done [#allocation6], 512
        $region52: #{tpu_custom_call.1} parent=39 // pred_fallthru
          _
        %s247 = sand.u32 %s31, 1
        %s248 = scalar_lea.sflag [#allocation3], %s247
        %s249 = sand.u32 %s31, 1
        %s250 = smul.addr %s249, 8
        %s251 = scalar_lea.vmem [#allocation2], %s250
        %p252 = pneg %p44
        %p253 = pneg %p41
        %p254 = pneg %p65
        %p255 = pneg %p62
        %p256 = pneg %p86
        %p257 = pneg %p83
        %p258 = pneg %p107
        %p259 = pneg %p104
        %p260 = pneg %p128
        %p261 = pneg %p125
        %p262 = pneg %p154
        %p263 = pneg %p151
        %s264 = sand.u32 %s141, 1
        %s265 = scalar_lea.sflag [#allocation4], %s264
        %s266 = sand.u32 %s141, 1
        %s267 = smul.addr %s266, 8
        %s268 = scalar_lea.vmem [#allocation8], %s267
        %v269 = vld [vmem:[%s2] sm:$0x7]
        %v270 = vld [vmem:[%s4] sm:$0x1]
        %v271 = vld [vmem:[%s234] sm:$0xff]
        %v272 = vld [vmem:[#allocation5] sm:$0xff]
        %v273 = vld [vmem:[#allocation5 + $0x8] sm:$0xff]
        %v274 = vld [vmem:[#allocation5 + $0x10] sm:$0xff]
        %v275 = vld [vmem:[#allocation5 + $0x18] sm:$0xff]
        %v276 = vlaneseq
        %v277 = vshrl.u32 %v276, 7
        %v278 = vsub.s32 0, %v277
        %v279 = vrot.slane %v269, %v278
        %vm280 = vcmask 261120
        %v282 = vsel %vm280, %v271, 0
        %284 = vmatprep.subr.mxu0 0.0
        %285 = vmatpush1.msra.mxu0 %v272
        %286 = vmatprep.subr.mxu0 0.0
        %287 = vmatpush1.msra.mxu0 %v273
        %288 = vmatprep.subr.mxu0 0.0
        %289 = vmatpush1.msra.mxu0 %v274
        %290 = vmatprep.subr.mxu0 0.0
        %291 = vmatpush1.msra.mxu0 %v275
        %292 = vmatprep.subr.mxu0 0.0
        %293 = vmatpush1.msra.mxu0 0.0
        %294 = vmatprep.subr.mxu0 0.0
        %295 = vmatpush1.msra.mxu0 0.0
        %296 = vmatprep.subr.mxu0 0.0
        %297 = vmatpush1.msra.mxu0 0.0
        %298 = vmatprep.subr.mxu0 0.0
        %299 = vmatpush1.msra.mxu0 0.0
        %300 = vmatprep.subr.mxu0 0.0
        %301 = vmatpush1.msra.mxu0 0.0
        %302 = vmatprep.subr.mxu0 0.0
        %303 = vmatpush1.msra.mxu0 0.0
        %304 = vmatprep.subr.mxu0 0.0
        %305 = vmatpush1.msra.mxu0 0.0
        %306 = vmatprep.subr.mxu0 0.0
        %307 = vmatpush1.msra.mxu0 0.0
        %308 = vmatprep.subr.mxu0 0.0
        %309 = vmatpush1.msra.mxu0 0.0
        %310 = vmatprep.subr.mxu0 0.0
        %311 = vmatpush1.msra.mxu0 0.0
        %312 = vmatprep.subr.mxu0 0.0
        %313 = vmatpush1.msra.mxu0 0.0
        %314 = vmatprep.subr.mxu0 0.0
        %315 = vmatpush1.msra.mxu0 0.0
        %316 = vmatprep.subr.mxu0 0.0
        %317 = vmatpush1.msra.mxu0 0.0
        %318 = vmatprep.subr.mxu0 0.0
        %319 = vmatpush1.msra.mxu0 0.0
        %320 = vmatprep.subr.mxu0 0.0
        %321 = vmatpush1.msra.mxu0 0.0
        %322 = vmatprep.subr.mxu0 0.0
        %323 = vmatpush1.msra.mxu0 0.0
        %324 = vmatprep.subr.mxu0 0.0
        %325 = vmatpush1.msra.mxu0 0.0
        %326 = vmatprep.subr.mxu0 0.0
        %327 = vmatpush1.msra.mxu0 0.0
        %328 = vmatprep.subr.mxu0 0.0
        %329 = vmatpush1.msra.mxu0 0.0
        %330 = vmatprep.subr.mxu0 0.0
        %331 = vmatpush1.msra.mxu0 0.0
        %332 = vmatprep.subr.mxu0 0.0
        %333 = vmatpush1.msra.mxu0 0.0
        %334 = vmatprep.subr.mxu0 0.0
        %335 = vmatpush1.msra.mxu0 0.0
        %336 = vmatprep.subr.mxu0 0.0
        %337 = vmatpush1.msra.mxu0 0.0
        %338 = vmatprep.subr.mxu0 0.0
        %339 = vmatpush1.msra.mxu0 0.0
        %340 = vmatprep.subr.mxu0 0.0
        %341 = vmatpush1.msra.mxu0 0.0
        %342 = vmatprep.subr.mxu0 0.0
        %343 = vmatpush1.msra.mxu0 0.0
        %344 = vmatprep.subr.mxu0 0.0
        %345 = vmatpush1.msra.mxu0 0.0
        %346 = vmatprep.subr.mxu0 0.0
        %347 = vmatpush1.msra.mxu0 0.0
        %348 = vmatprep.mubr.f32.mxu0 0.0
        %349 = vmatmul.mubr.f32.gmra.mrb[0].mxu0 %v282
        %v350 = vpop.f32.mrb[0].mxu0
        %v351 = vadd.f32 %v279, %v350
        %v352 = vpop.f32.mrb[0].mxu0
        %353 = vdwg.mxu0
        %v354 = vsel %vm280, %v351, 0.0
        %355 = vadd.xlane.f32.xlu0 %v354
        %v356 = vpop.xlane.xlu0 %355
        %v357 = vrcp.pop 32.0
        %v358 = vmul.f32 %v356, %v357
        %v359 = vsub.f32 %v351, %v358
        %v360 = vmul.f32 %v359, %v359
        %v361 = vsel %vm280, %v360, 0.0
        %362 = vadd.xlane.f32.xlu0 %v361
        %v363 = vpop.xlane.xlu0 %362
        %v364 = vmul.f32 %v363, %v357
        %v365 = vadd.f32 %v364, 1e-05
        %v366 = vrsqrt.pop %v365
        %v367 = vmul.f32 %v359, %v366
        %v368 = vlaneseq
        %v369 = vshrl.u32 %v368, 7
        %v370 = vsub.s32 1, %v369
        %v371 = vrot.slane %v269, %v370
        %v372 = vmul.f32 %v367, %v371
        %v373 = vlaneseq
        %v374 = vshrl.u32 %v373, 7
        %v375 = vsub.s32 2, %v374
        %v376 = vrot.slane %v269, %v375
        %v377 = vadd.f32 %v372, %v376
        %v378 = vmax.f32 %v377, 0.0
        %v379 = vld [vmem:[#allocation7] sm:$0xff]
        %v380 = vld [vmem:[#allocation7 + $0x8] sm:$0xff]
        %v381 = vld [vmem:[#allocation7 + $0x10] sm:$0xff]
        %v382 = vld [vmem:[#allocation7 + $0x18] sm:$0xff]
        %v384 = vlaneseq
        %v385 = vshrl.u32 %v384, 7
        %v386 = vsub.s32 0, %v385
        %v387 = vrot.slane %v270, %v386
        %v390 = vsel %vm280, %v378, 0
        %392 = vmatprep.subr.mxu0 0.0
        %393 = vmatpush1.msra.mxu0 %v379
        %394 = vmatprep.subr.mxu0 0.0
        %395 = vmatpush1.msra.mxu0 %v380
        %396 = vmatprep.subr.mxu0 0.0
        %397 = vmatpush1.msra.mxu0 %v381
        %398 = vmatprep.subr.mxu0 0.0
        %399 = vmatpush1.msra.mxu0 %v382
        %400 = vmatprep.subr.mxu0 0.0
        %401 = vmatpush1.msra.mxu0 0.0
        %402 = vmatprep.subr.mxu0 0.0
        %403 = vmatpush1.msra.mxu0 0.0
        %404 = vmatprep.subr.mxu0 0.0
        %405 = vmatpush1.msra.mxu0 0.0
        %406 = vmatprep.subr.mxu0 0.0
        %407 = vmatpush1.msra.mxu0 0.0
        %408 = vmatprep.subr.mxu0 0.0
        %409 = vmatpush1.msra.mxu0 0.0
        %410 = vmatprep.subr.mxu0 0.0
        %411 = vmatpush1.msra.mxu0 0.0
        %412 = vmatprep.subr.mxu0 0.0
        %413 = vmatpush1.msra.mxu0 0.0
        %414 = vmatprep.subr.mxu0 0.0
        %415 = vmatpush1.msra.mxu0 0.0
        %416 = vmatprep.subr.mxu0 0.0
        %417 = vmatpush1.msra.mxu0 0.0
        %418 = vmatprep.subr.mxu0 0.0
        %419 = vmatpush1.msra.mxu0 0.0
        %420 = vmatprep.subr.mxu0 0.0
        %421 = vmatpush1.msra.mxu0 0.0
        %422 = vmatprep.subr.mxu0 0.0
        %423 = vmatpush1.msra.mxu0 0.0
        %424 = vmatprep.subr.mxu0 0.0
        %425 = vmatpush1.msra.mxu0 0.0
        %426 = vmatprep.subr.mxu0 0.0
        %427 = vmatpush1.msra.mxu0 0.0
        %428 = vmatprep.subr.mxu0 0.0
        %429 = vmatpush1.msra.mxu0 0.0
        %430 = vmatprep.subr.mxu0 0.0
        %431 = vmatpush1.msra.mxu0 0.0
        %432 = vmatprep.subr.mxu0 0.0
        %433 = vmatpush1.msra.mxu0 0.0
        %434 = vmatprep.subr.mxu0 0.0
        %435 = vmatpush1.msra.mxu0 0.0
        %436 = vmatprep.subr.mxu0 0.0
        %437 = vmatpush1.msra.mxu0 0.0
        %438 = vmatprep.subr.mxu0 0.0
        %439 = vmatpush1.msra.mxu0 0.0
        %440 = vmatprep.subr.mxu0 0.0
        %441 = vmatpush1.msra.mxu0 0.0
        %442 = vmatprep.subr.mxu0 0.0
        %443 = vmatpush1.msra.mxu0 0.0
        %444 = vmatprep.subr.mxu0 0.0
        %445 = vmatpush1.msra.mxu0 0.0
        %446 = vmatprep.subr.mxu0 0.0
        %447 = vmatpush1.msra.mxu0 0.0
        %448 = vmatprep.subr.mxu0 0.0
        %449 = vmatpush1.msra.mxu0 0.0
        %450 = vmatprep.subr.mxu0 0.0
        %451 = vmatpush1.msra.mxu0 0.0
        %452 = vmatprep.subr.mxu0 0.0
        %453 = vmatpush1.msra.mxu0 0.0
        %454 = vmatprep.subr.mxu0 0.0
        %455 = vmatpush1.msra.mxu0 0.0
        %456 = vmatprep.mubr.f32.mxu0 0.0
        %457 = vmatmul.mubr.f32.gmra.mrb[0].mxu0 %v390
        %v458 = vpop.f32.mrb[0].mxu0
        %v459 = vadd.f32 %v387, %v458
        %v460 = vpop.f32.mrb[0].mxu0
        %461 = vdwg.mxu0
        %462 = vst [vmem:[%s268] sm:$0xff] %v459
        %s463 = sand.u32 %s141, 1
        %s464 = scalar_lea.sflag [#allocation4], %s463
        %s465 = sand.u32 %s141, 1
        %s466 = smul.addr %s465, 8
        %s467 = scalar_lea.vmem [#allocation8], %s466
        // Predicated region
        $region53: #{tpu_custom_call.1} parent=39 // pred_check
          %p468 = pneg %p151
        $region54: #{tpu_custom_call.1} parent=39 // pred_check_branch
          %470 = sbr.rel (%p468) target = $region56
        $region55: #{tpu_custom_call.1} parent=39 // pred_region
          %s472 = ssub.s32 128, 128
          %473 = vsyncadd %s464, %s472
          %s474 = smul.addr %s23, 128
          %s475 = scalar_lea.hbm %s5, %s474
          %s477 = sshll.u32 %s467, 4
          %s478 = int_to_ptr.vmem [resolvable:$true] %s477
          %480 = dma.vmem_to_hbm [thread:$0]  %s478, 128, %s475, %s464
        $region56: #{tpu_custom_call.1} parent=39 // pred_fallthru
          _
      $region40: #{tpu_custom_call.1} parent=5 // pred_fallthru
        _
      %p481 = scmp.le.s32.totalorder 2, %s18
      // Predicated region
      $region57: #{tpu_custom_call.1} parent=5 // pred_check
        %p482 = pneg %p481
      $region58: #{tpu_custom_call.1} parent=5 // pred_check_branch
        %484 = sbr.rel (%p482) target = $region60
      $region59: #{tpu_custom_call.1} parent=5 // pred_region
        %s485 = ssub.s32 %s18, 2
        // Predicated region
        $region61: #{tpu_custom_call.1} parent=59 // pred_check
          %p486 = pneg %p157
        $region62: #{tpu_custom_call.1} parent=59 // pred_check_branch
          %488 = sbr.rel (%p486) target = $region64
        $region63: #{tpu_custom_call.1} parent=59 // pred_region
          %s489 = sand.u32 %s142, 1
          %s490 = scalar_lea.sflag [#allocation4], %s489
          %s491 = sand.u32 %s142, 1
          %s492 = smul.addr %s491, 8
          %s493 = scalar_lea.vmem [#allocation8], %s492
          %494 = dma.done %s490, 128
        $region64: #{tpu_custom_call.1} parent=59 // pred_fallthru
          _
      $region60: #{tpu_custom_call.1} parent=5 // pred_fallthru
        _
    $region6: #{tpu_custom_call.1} parent=1 // loop_footer
      %s22 = sadd.s32 1, %s18
    $region7: #{tpu_custom_call.1} parent=1 // loop_footer_branch
      %17 = sbr.rel target = $region3
    $region8: #{tpu_custom_call.1} parent=1 // loop_exit
      _
    %495 = vsyncpa [#allocation3], 1
    %s496 = scalar_lea.sflag [#allocation3], 1
    %497 = vsyncpa %s496, 1
    %498 = vsyncpa [#allocation6], 1
    %499 = vsyncpa [#allocation4], 1
    %s500 = scalar_lea.sflag [#allocation4], 1
    %501 = vsyncpa %s500, 1

</llo_original>
